<compile_context>
chip_gen: v7x
topology: tpu7x:2x2x1
jax: 0.10.0
libtpu: 0.0.40
codegen_flags: <defaults>
</compile_context>

<pallas_src>
import abc

import jax
import jax.numpy as jnp
from jax import lax
from jax.experimental import pallas as pl
from jax.experimental.pallas import tpu as pltpu


_LANE = 128
_SUBLANE = 8
# (4096, 128) f32 tile = 2 MiB.  Prox / fused kernels stream one input tile and
# one output tile, double-buffered: ~8 MiB VMEM.  Fits v5e's 16 MiB scoped-VMEM
# default and is large enough to hide per-step overhead on v6e/v7x HBM BW.
_MAX_TILE_ROWS = 4096
# Leading grid axis so the streaming L1 reductions can shard across v7x's two
# TensorCores (degrades to a serial length-2 loop on v5e/v6e).
_NUM_CORES = 2


# ----------------------------- Pallas kernels -----------------------------

def _soft_threshold_kernel(thr_ref, x_ref, o_ref):
    """Elementwise prox of L1: o = x - clip(x, -t, t)  (== sign(x)*max(|x|-t,0))."""
    t = thr_ref[0]                       # scalar steplength from SMEM
    x = x_ref[...]
    o_ref[...] = x - jnp.clip(x, -t, t)


def _tile_partial(ax, tile_rows):
    """Reduce an (tile_rows, 128) f32 tile to an (8, 128) vector partial sum."""
    if tile_rows % _SUBLANE == 0:
        # Pure VPU adds across vregs; no per-step cross-lane/sublane XLU work.
        return ax.reshape(tile_rows // _SUBLANE, _SUBLANE, _LANE).sum(axis=0)
    # Rare fallback (tile_rows < a sublane multiple — tiny inputs only).
    row_sum = jnp.sum(ax, axis=0, keepdims=True)                  # (1, 128)
    return jnp.concatenate(
        [row_sum, jnp.zeros((_SUBLANE - 1, _LANE), jnp.float32)], axis=0)


def _make_value_kernel(rows, tile_rows, tiles_per_core, needs_mask):
    """Streamed |x| reduction into per-core (8,128) vector partial sums."""

    def kernel(x_ref, psum_ref):
        k = pl.program_id(1)

        @pl.when(k == 0)
        def _():
            psum_ref[...] = jnp.zeros_like(psum_ref)

        ax = jnp.abs(x_ref[...]).astype(jnp.float32)   # cast in-kernel (VPU)
        if needs_mask:
            # Only generated when the (core x tile) coverage is inexact.
            g = pl.program_id(0) * tiles_per_core + k
            row_ids = g * tile_rows + lax.broadcasted_iota(jnp.int32, ax.shape, 0)
            ax = jnp.where(row_ids < rows, ax, 0.0)
        psum_ref[0] += _tile_partial(ax, tile_rows)

    return kernel


def _make_fused_kernel(rows, tile_rows, tiles_per_core, needs_mask):
    """One pass over x: soft-thresholded output + per-core |x| partial sums."""

    def kernel(thr_ref, x_ref, o_ref, psum_ref):
        k = pl.program_id(1)

        @pl.when(k == 0)
        def _():
            psum_ref[...] = jnp.zeros_like(psum_ref)

        t = thr_ref[0]
        x = x_ref[...]
        o_ref[...] = x - jnp.clip(x, -t, t)

        ax = jnp.abs(x).astype(jnp.float32)
        if needs_mask:
            g = pl.program_id(0) * tiles_per_core + k
            row_ids = g * tile_rows + lax.broadcasted_iota(jnp.int32, ax.shape, 0)
            ax = jnp.where(row_ids < rows, ax, 0.0)
        psum_ref[0] += _tile_partial(ax, tile_rows)

    return kernel


# ------------------------------ JAX wrappers -------------------------------

def _to_lane_dense_2d(x):
    """Flatten to (rows, 128) so the last dim maps onto the 128-lane vreg axis."""
    flat = x.reshape(-1)
    n = flat.shape[0]
    rows = pl.cdiv(n, _LANE)
    pad = rows * _LANE - n
    if pad:
        # TODO(synk): ragged lane tail (n % 128 != 0) still pays a zero-pad +
        # trailing-slice HBM pass; zeros are neutral for both prox and |x| so
        # correctness holds.  A 1-D BlockSpec with a partial last block would
        # remove these extra passes.  Never triggered for the NCHW test shape.
        flat = jnp.pad(flat, (0, pad))
    return flat.reshape(rows, _LANE), n, pad


def _tile_rows_for(rows):
    # Small inputs: single full-extent block (always legal).
    # Large inputs: 4096-row (2 MiB f32) tiles, multiple of the 8-sublane unit.
    return rows if rows <= _MAX_TILE_ROWS else _MAX_TILE_ROWS


def _core_split(rows, tile_rows):
    """Split row tiles across _NUM_CORES; return (kt, needs_mask, x_index_map)."""
    total_tiles = pl.cdiv(rows, tile_rows)
    kt = pl.cdiv(total_tiles, _NUM_CORES)
    exact = (kt * _NUM_CORES * tile_rows) == rows
    last_tile = total_tiles - 1
    if exact:
        x_index = lambda c, k: (c * kt + k, 0)
    else:
        # Clamp so dummy iterations never address an out-of-range block; their
        # contribution to the sum is zeroed by the in-kernel row mask, and a
        # re-written prox block carries identical bytes (benign).
        x_index = lambda c, k: (jnp.minimum(c * kt + k, last_tile), 0)
    return kt, (not exact), x_index


def soft_threshold_pallas(x, steplength, donate_x=False):
    """Elementwise soft-threshold (prox of lambda*||.||_1 with lambda*step folded in)."""
    x2d, n, pad = _to_lane_dense_2d(x)
    rows = x2d.shape[0]
    tr = _tile_rows_for(rows)
    grid = (pl.cdiv(rows, tr),)
    thr = jnp.asarray([steplength], dtype=x2d.dtype)
    itemsize = jnp.dtype(x2d.dtype).itemsize

    out2d = pl.pallas_call(
        _soft_threshold_kernel,
        out_shape=jax.ShapeDtypeStruct((rows, _LANE), x2d.dtype),
        grid=grid,
        in_specs=[
            pl.BlockSpec(memory_space=pltpu.MemorySpace.SMEM),   # steplength scalar
            pl.BlockSpec((tr, _LANE), lambda i: (i, 0)),         # x row tile (VMEM)
        ],
        out_specs=pl.BlockSpec((tr, _LANE), lambda i: (i, 0)),
        input_output_aliases=({1: 0} if donate_x else {}),
        compiler_params=pltpu.CompilerParams(
            dimension_semantics=("parallel",)),                  # megacore-shardable
        cost_estimate=pl.CostEstimate(
            flops=3 * rows * _LANE,
            transcendentals=0,
            bytes_accessed=2 * rows * _LANE * itemsize),
    )(thr, x2d)

    if pad:
        return out2d.reshape(-1)[:n].reshape(x.shape)
    return out2d.reshape(x.shape)


def l1_value_pallas(x, lambda_reg):
    """lambda * sum(|x|) via a megacore-shardable streaming reduction."""
    x2d, _, _ = _to_lane_dense_2d(x)
    rows = x2d.shape[0]
    tr = _tile_rows_for(rows)
    kt, needs_mask, x_index = _core_split(rows, tr)
    itemsize = jnp.dtype(x2d.dtype).itemsize

    kernel = _make_value_kernel(rows, tr, kt, needs_mask)
    partials = pl.pallas_call(
        kernel,
        out_shape=jax.ShapeDtypeStruct((_NUM_CORES, _SUBLANE, _LANE), jnp.float32),
        grid=(_NUM_CORES, kt),
        in_specs=[pl.BlockSpec((tr, _LANE), x_index)],
        out_specs=pl.BlockSpec((1, _SUBLANE, _LANE), lambda c, k: (c, 0, 0)),
        compiler_params=pltpu.CompilerParams(
            dimension_semantics=("parallel", "arbitrary")),
        cost_estimate=pl.CostEstimate(
            flops=2 * rows * _LANE,
            transcendentals=0,
            bytes_accessed=rows * _LANE * itemsize),
    )(x2d)
    # Cross-lane/sublane reduce + lambda multiply done once here (tiny XLA op).
    return jnp.float32(lambda_reg) * jnp.sum(partials)


def prox_and_value_pallas(x, steplength, lambda_reg, donate_x=False):
    """Fused single pass over x: (prox(x, step), lambda*||x||_1)."""
    x2d, n, pad = _to_lane_dense_2d(x)
    rows = x2d.shape[0]
    tr = _tile_rows_for(rows)
    kt, needs_mask, x_index = _core_split(rows, tr)
    thr = jnp.asarray([steplength], dtype=x2d.dtype)
    itemsize = jnp.dtype(x2d.dtype).itemsize

    kernel = _make_fused_kernel(rows, tr, kt, needs_mask)
    out2d, partials = pl.pallas_call(
        kernel,
        out_shape=(
            jax.ShapeDtypeStruct((rows, _LANE), x2d.dtype),
            jax.ShapeDtypeStruct((_NUM_CORES, _SUBLANE, _LANE), jnp.float32),
        ),
        grid=(_NUM_CORES, kt),
        in_specs=[
            pl.BlockSpec(memory_space=pltpu.MemorySpace.SMEM),   # steplength
            pl.BlockSpec((tr, _LANE), x_index),                  # x row tile (VMEM)
        ],
        out_specs=(
            pl.BlockSpec((tr, _LANE), x_index),
            pl.BlockSpec((1, _SUBLANE, _LANE), lambda c, k: (c, 0, 0)),
        ),
        input_output_aliases=({1: 0} if donate_x else {}),
        compiler_params=pltpu.CompilerParams(
            dimension_semantics=("parallel", "arbitrary")),
        cost_estimate=pl.CostEstimate(
            flops=5 * rows * _LANE,
            transcendentals=0,
            bytes_accessed=2 * rows * _LANE * itemsize),
    )(thr, x2d)

    value = jnp.float32(lambda_reg) * jnp.sum(partials)
    if pad:
        y = out2d.reshape(-1)[:n].reshape(x.shape)
    else:
        y = out2d.reshape(x.shape)
    return y, value


# --------------------------- Module-like classes ----------------------------

class Regularizer(abc.ABC):
    """Abstract base class mirroring the PyTorch Regularizer."""

    @abc.abstractmethod
    def value(self, x):
        ...

    @abc.abstractmethod
    def proximal_operator(self, x, steplength: float):
        ...

    def forward(self, x, steplength: float):
        # Default forward behavior: apply the proximal operator (matches spec).
        return self.proximal_operator(x, steplength)

    __call__ = forward


class L1Regularizer(Regularizer):
    """Concrete regularizer: R(x) = lambda * ||x||_1."""

    def __init__(self, lambda_reg: float = 0.1):
        self.lambda_reg = float(lambda_reg)

    def value(self, x):
        return l1_value_pallas(x, self.lambda_reg)

    def proximal_operator(self, x, steplength: float):
        return soft_threshold_pallas(x, steplength)

    def prox_and_value(self, x, steplength: float):
        """Fused: (prox_R(x, step), R(x)) with a single HBM pass over x."""
        return prox_and_value_pallas(x, steplength, self.lambda_reg)


# ---------------------------------- main ------------------------------------

if __name__ == "__main__":
    key = jax.random.PRNGKey(0)
    x = jax.random.normal(key, (2, 4, 16, 16), dtype=jnp.float32)  # NCHW
    steplength = 0.25

    reg = L1Regularizer(lambda_reg=0.1)

    # forward == proximal operator (soft threshold), the hot path kernel
    y = jax.block_until_ready(reg(x, steplength))

    # value() streamed reduction kernel (per-core partials summed in wrapper)
    v = jax.block_until_ready(reg.value(x))

    # fused single-pass kernel (prox + value)
    y2, v2 = reg.prox_and_value(x, steplength)
    y2 = jax.block_until_ready(y2)
    v2 = jax.block_until_ready(v2)

    # donation variant of the hot prox path (x's buffer reusable by XLA)
    y3 = jax.block_until_ready(
        soft_threshold_pallas(x + 0.0, steplength, donate_x=True))

    # correctness checks against plain-JAX reference
    y_ref = jnp.sign(x) * jnp.maximum(jnp.abs(x) - steplength, 0.0)
    v_ref = 0.1 * jnp.sum(jnp.abs(x))
    assert y.shape == x.shape and y.dtype == x.dtype
    assert jnp.allclose(y, y_ref, atol=1e-6)
    assert jnp.allclose(v, v_ref, rtol=1e-5)
    assert jnp.allclose(y2, y_ref, atol=1e-6)
    assert jnp.allclose(v2, v_ref, rtol=1e-5)
    assert jnp.allclose(y3, y_ref, atol=1e-6)

    print("KERNEL_OK")
</pallas_src>

<mosaic_0001>
module attributes {stable_mosaic.version = 11 : i64} {
  func.func @_soft_threshold_kernel(%arg0: i32, %arg1: memref<1xf32, #tpu.memory_space<smem>>, %arg2: memref<16x128xf32, #tpu.memory_space<vmem>>, %arg3: memref<16x128xf32, #tpu.memory_space<vmem>>) attributes {dimension_semantics = [#tpu.dimension_semantics<parallel>], iteration_bounds = array<i64: 1>, scalar_prefetch = 0 : i64, scratch_operands = 0 : i64, tpu.core_type = #tpu.core_type<tc>, window_params = [{transform_indices = @transform_0, window_bounds = array<i64: 1>}, {transform_indices = @transform_1, window_bounds = array<i64: 16, 128>}, {transform_indices = @transform_2, window_bounds = array<i64: 16, 128>}]} {
    %c0 = arith.constant 0 : index
    %0 = memref.load %arg1[%c0] : memref<1xf32, #tpu.memory_space<smem>>
    %c0_0 = arith.constant 0 : index
    %c0_1 = arith.constant 0 : index
    %1 = vector.load %arg2[%c0_0, %c0_1] : memref<16x128xf32, #tpu.memory_space<vmem>>, vector<16x128xf32>
    %cst = arith.constant 0.000000e+00 : f32
    %2 = arith.subf %cst, %0 : f32
    %3 = vector.broadcast %2 : f32 to vector<16x128xf32>
    %4 = arith.maximumf %3, %1 : vector<16x128xf32>
    %5 = vector.broadcast %0 : f32 to vector<16x128xf32>
    %6 = arith.minimumf %5, %4 : vector<16x128xf32>
    %7 = arith.subf %1, %6 : vector<16x128xf32>
    %c0_2 = arith.constant 0 : index
    %c0_3 = arith.constant 0 : index
    %8 = vector.load %arg3[%c0_2, %c0_3] : memref<16x128xf32, #tpu.memory_space<vmem>>, vector<16x128xf32>
    tpu.vector_store %arg3[%c0_2, %c0_3], %7 {strides = array<i32>} : memref<16x128xf32, #tpu.memory_space<vmem>>, vector<16x128xf32>,
    return
  }
  func.func @transform_0(%arg0: i32) -> i32 {
    %c0_i32 = arith.constant 0 : i32
    %c0_i32_0 = arith.constant 0 : i32
    return %c0_i32 : i32
  }
  func.func @transform_1(%arg0: i32) -> (i32, i32) {
    %c0_i32 = arith.constant 0 : i32
    %c0_i32_0 = arith.constant 0 : i32
    return %arg0, %c0_i32 : i32, i32
  }
  func.func @transform_2(%arg0: i32) -> (i32, i32) {
    %c0_i32 = arith.constant 0 : i32
    %c0_i32_0 = arith.constant 0 : i32
    return %arg0, %c0_i32 : i32, i32
  }
}

</mosaic_0001>

<llo_original>
// kernel: tpu_custom_call.1
$region0: #{tpu_custom_call.1}
  #allocation0 [shape = 'u32[]', space=smem, size = 0x4, offset = 0x4, fixed_abs, tag = 'smem constant byte address 0x4 - core index']
  #allocation1 [shape = 'u32[144,128]{1,0:T(1,128)}', space=vmem, size = 0x12000, scoped, tag = 'internal scratch']
  #allocation2 [shape = 'f32[1]{0:T(128)S(6)}', space=smem, size = 0x200, scoped, tag = 'scoped memory for tpu_custom_call.1']
  %s0 = inlined_call_operand.<no memory space> [shape: f32[1], index: 0, kind: input, shape index: {}]
  %s1 = inlined_call_operand.hbm [shape: f32[16,128], index: 1, kind: input, shape index: {}]
  %s2 = inlined_call_operand.hbm [shape: f32[16,128], index: 2, kind: output, shape index: {}]
  %s3 = sld [smem:[#allocation0]]
  $region22: #{tpu_custom_call.1} parent=0
    _
  %s5 = ssub.s32 1, %s3
  %s6 = scalar_select 0, %s5, %s3
  %7 = sst [smem:[#allocation2]] %s0
  $region1: #{tpu_custom_call.1} parent=0
    #allocation3 [shape = 'u8[8192]{0}', space=vmem, size = 0x2000, scoped, tag = 'input window, operand 1, single buffered']
    #allocation4 [shape = 's32[1]{0}', space=sflag, size = 0x4, scoped, tag = 'scoped memory for tpu_custom_call.1']
    #allocation5 [shape = 's32[1]{0}', space=sflag, size = 0x4, scoped, tag = 'scoped memory for tpu_custom_call.1']
    #allocation6 [shape = 'u8[8192]{0}', space=vmem, size = 0x2000, scoped, tag = 'output window, operand 0, single buffered']
    %8 = vsyncpa [#allocation4], 0
    %9 = vsyncpa [#allocation5], 0
    // Predicated region
    $region2: #{tpu_custom_call.1} parent=1 // pred_check
      _
    $region3: #{tpu_custom_call.1} parent=1 // pred_check_branch
      %11 = sbr.rel (0) target = $region5
    $region4: #{tpu_custom_call.1} parent=1 // pred_region
      _
    $region5: #{tpu_custom_call.1} parent=1 // pred_fallthru
      _
    // Predicated region
    $region6: #{tpu_custom_call.1} parent=1 // pred_check
      _
    $region7: #{tpu_custom_call.1} parent=1 // pred_check_branch
      %13 = sbr.rel (0) target = $region9
    $region8: #{tpu_custom_call.1} parent=1 // pred_region
      %s15 = ssub.s32 256, 256
      %16 = vsyncadd [#allocation4], %s15
      %s17 = sshll.u32 [#allocation3], 4
      %s18 = int_to_ptr.vmem [resolvable:$true] %s17
      %23 = dma.hbm_to_vmem [thread:$0]  %s1, 256, %s18, [#allocation4], 128, 128, 8
    $region9: #{tpu_custom_call.1} parent=1 // pred_fallthru
      _
    // Predicated region
    $region10: #{tpu_custom_call.1} parent=1 // pred_check
      _
    $region11: #{tpu_custom_call.1} parent=1 // pred_check_branch
      %25 = sbr.rel (0) target = $region13
    $region12: #{tpu_custom_call.1} parent=1 // pred_region
      %26 = dma.done [#allocation4], 256
    $region13: #{tpu_custom_call.1} parent=1 // pred_fallthru
      _
    %s27 = sld [smem:[#allocation2]]
    %v28 = vld [vmem:[#allocation3] sm:$0xff]
    %v29 = vld [vmem:[#allocation3 + $0x8] sm:$0xff]
    %s30 = ssub.f32 0.0, %s27
    %v31 = vstv %s30
    %v32 = vmax.f32 %v31, %v28
    %v33 = vmax.f32 %v31, %v29
    %v34 = vstv %s27
    %v35 = vmin.f32 %v34, %v32
    %v36 = vmin.f32 %v34, %v33
    %v37 = vsub.f32 %v28, %v35
    %v38 = vsub.f32 %v29, %v36
    %39 = vst [vmem:[#allocation6] sm:$0xff] %v37
    %40 = vst [vmem:[#allocation6 + $0x8] sm:$0xff] %v38
    // Predicated region
    $region14: #{tpu_custom_call.1} parent=1 // pred_check
      _
    $region15: #{tpu_custom_call.1} parent=1 // pred_check_branch
      %42 = sbr.rel (0) target = $region17
    $region16: #{tpu_custom_call.1} parent=1 // pred_region
      %s44 = ssub.s32 256, 256
      %45 = vsyncadd [#allocation5], %s44
      %s46 = sshll.u32 [#allocation6], 4
      %s47 = int_to_ptr.vmem [resolvable:$true] %s46
      %52 = dma.vmem_to_hbm [thread:$0]  %s47, 256, %s2, [#allocation5], 128, 128, 8
    $region17: #{tpu_custom_call.1} parent=1 // pred_fallthru
      _
    // Predicated region
    $region18: #{tpu_custom_call.1} parent=1 // pred_check
      _
    $region19: #{tpu_custom_call.1} parent=1 // pred_check_branch
      %54 = sbr.rel (0) target = $region21
    $region20: #{tpu_custom_call.1} parent=1 // pred_region
      %55 = dma.done [#allocation5], 256
    $region21: #{tpu_custom_call.1} parent=1 // pred_fallthru
      _
    %56 = vsyncpa [#allocation4], 1
    %57 = vsyncpa [#allocation5], 1

</llo_original>
